<compile_context>
chip_gen: v7x
topology: tpu7x:2x2x1
jax: 0.10.0
libtpu: 0.0.40
codegen_flags: <defaults>
</compile_context>

<pallas_src>
import functools
import math

import jax
import jax.numpy as jnp
from jax.experimental import pallas as pl
from jax.experimental.pallas import tpu as pltpu

_LANE = 128
_SUB = 8


def _pad8(v):
    return -(-v // _SUB) * _SUB


def _vmem_budget(default=8 << 20):
    """Conservative per-grid-step VMEM budget (bytes), generation-aware when possible.

    Kept <= 8 MiB so (double-buffered tiles + resident weights) stays safely under the
    default scoped-VMEM limits on every generation (16 MiB v5e, 32 MiB v6e/v7x).
    """
    try:
        cap = int(pltpu.get_tpu_info().vmem_capacity_bytes)
        return max(4 << 20, min(cap // 16, default))
    except Exception:
        return default


def _num_tensorcores():
    """2 on v7x-class parts (2 TCs/chip), else 1 (v5e/v6e). Used only for heuristics."""
    try:
        kind = jax.devices()[0].device_kind.lower()
        return 2 if ("v7" in kind or "7x" in kind) else 1
    except Exception:
        return 1


# --------------------------------------------------------------------------------------
# start_conv: 1x1 Conv2d == per-position channel-mixing matmul
# --------------------------------------------------------------------------------------
def _conv1x1_kernel(x_ref, w_ref, b_ref, o_ref):
    """x_ref: (TB, Cin, TL), w_ref: (Cout, Cin), b_ref: (Cout, 1), o_ref: (TB, Cout, TL)."""
    w = w_ref[...]
    bias = b_ref[...]
    for bi in range(x_ref.shape[0]):               # TB is small & static -> unrolled
        y = jnp.dot(w, x_ref[bi], preferred_element_type=jnp.float32)   # (Cout, TL)
        o_ref[bi] = (y + bias).astype(o_ref.dtype)


def _pick_tl(length, tb, cin, cout, in_item, out_item):
    if length % _LANE != 0:
        return length              # single full-width block (block dim == array dim)
    per_lane = 2 * tb * (_pad8(cin) * in_item + _pad8(cout) * out_item)   # dbl-buffered
    budget = _vmem_budget()
    tl = _LANE
    while length % (2 * tl) == 0 and 2 * tl * per_lane <= budget:
        tl *= 2
    return tl


def conv1x1_pallas(x, w, bias, out_dtype):
    """1x1 Conv2d: x (B, Cin, N, T), w (Cout, Cin), bias (Cout,) -> (B, Cout, N, T).

    Emits `out_dtype` (bf16 in the fast path) directly so the activation slab is
    written to HBM exactly once in its storage dtype.
    """
    B, Cin, N, T = x.shape
    Cout = w.shape[0]
    L = N * T
    x2 = x.reshape(B, Cin, L)                      # free row-major reshape
    TB = B if B <= 8 else 1                        # fold a small batch into one block
    tl = _pick_tl(L, TB, Cin, Cout, x.dtype.itemsize, jnp.dtype(out_dtype).itemsize)
    out = pl.pallas_call(
        _conv1x1_kernel,
        out_shape=jax.ShapeDtypeStruct((B, Cout, L), out_dtype),
        grid_spec=pltpu.PrefetchScalarGridSpec(
            num_scalar_prefetch=0,
            grid=(B // TB, L // tl),
            in_specs=[
                pl.BlockSpec((TB, Cin, tl), lambda bi, li: (bi, 0, li)),
                pl.BlockSpec((Cout, Cin), lambda bi, li: (0, 0)),    # weight (resident)
                pl.BlockSpec((Cout, 1), lambda bi, li: (0, 0)),      # bias (resident)
            ],
            out_specs=pl.BlockSpec((TB, Cout, tl), lambda bi, li: (bi, 0, li)),
        ),
        compiler_params=pltpu.CompilerParams(
            dimension_semantics=("parallel", "parallel")),
    )(x2, w, bias.reshape(-1, 1))
    return out.reshape(B, Cout, N, T)


# --------------------------------------------------------------------------------------
# GCN1: fused multi-hop, dual-adjacency, lane-packed graph conv
# --------------------------------------------------------------------------------------
def _gcn_packed_kernel(h_ref, s_ref, w_ref, b_ref, o1_ref, o2_ref, *,
                       alpha, hops, mxu_dtype):
    """Fused multi-hop GCN for BOTH adjacencies on one lane-packed tile.

    h_ref:  (TRP, 128)       lane-packed activations (128/C original rows per packed row)
    s_ref:  (2, 128)  f32    per-lane diag(adj)/rowsum scale, row 0 = adj, row 1 = adj_aug
    w_ref:  (hops, 128, 128) block-diagonal I_{128/C} ⊗ Wᵀ weights (storage dtype)
    b_ref:  (hops, 1, 128)   lane-tiled biases (f32)
    o1/o2:  (TRP, 128)       lane-dense outputs for adj / adj_aug
    """
    h0 = h_ref[...].astype(jnp.float32)
    s_all = s_ref[...]
    for a, out_ref in enumerate((o1_ref, o2_ref)):   # two adjacencies, same input slab
        s = s_all[a:a + 1, :]                        # (1, 128)
        h = h0
        for i in range(hops):                        # hop count small & static -> unrolled
            hs = (h * s).astype(mxu_dtype)           # einsum('kk,mkc->mkc') == lane scale
            y = jnp.dot(hs, w_ref[i], preferred_element_type=jnp.float32)   # MXU, K=128
            y = y + b_ref[i]
            h = jnp.where(y > 0, y, alpha * y)       # LeakyReLU(alpha), f32 elementwise
        out_ref[...] = h.astype(out_ref.dtype)       # full-lane-width (unmasked) store


def _pick_trp(rp, item):
    """Packed rows per grid step; rp is a multiple of 8."""
    per_row = 2 * _LANE * item * 3           # double-buffered: 1 input + 2 outputs
    budget = _vmem_budget()
    max_rows = max(_SUB, (budget // per_row) // _SUB * _SUB)
    trp = min(rp, max_rows)
    trp -= trp % _SUB
    while trp > _SUB and rp % trp != 0:
        trp -= _SUB
    if trp <= 0 or rp % trp != 0:
        trp = rp
    if _num_tensorcores() >= 2:              # keep both v7x TCs fed with an even split
        steps = rp // trp
        big = rp * _LANE * item > (2 << 20)
        if steps == 1 and rp % (2 * _SUB) == 0 and big:
            trp = rp // 2
        elif steps > 1 and steps % 2 == 1 and trp % (2 * _SUB) == 0 and big:
            trp //= 2
    return trp


def _diag_scale(adj):
    """diag(adj) / clamp(rowsum): all that einsum('kk,mkc->mkc', adj_norm, h) needs."""
    rowsum = jnp.sum(adj, axis=-1)
    denom = jnp.where(rowsum > 1e-8, rowsum, jnp.float32(1e-8))
    return (jnp.diagonal(adj) / denom).astype(jnp.float32)            # (N,)


def _gcn_ref_jax(h_c, a, weights, biases, alpha):
    """Plain-JAX GCN1 (used only as the fallback for non-packable shapes)."""
    b, c, n, t = h_c.shape
    h = h_c.reshape(-1, n, c).astype(jnp.float32)
    rowsum = jnp.sum(a, axis=-1, keepdims=True)
    a_n = a / jnp.where(rowsum > 1e-8, rowsum, 1e-8)
    d = jnp.diagonal(a_n)
    for w, bb in zip(weights, biases):
        h = h * d[None, :, None]
        h = h @ w.T + bb
        h = jnp.where(h > 0, h, alpha * h)
    return h.reshape(b, c, n, -1)


def gcn1_dual_forward(h_c, adj, adj_aug, weights, biases, alpha, storage_dtype):
    """GCN1(h_c, adj) and GCN1(h_c, adj_aug) fused: one read of h_c, two outputs."""
    b, c, n, t = h_c.shape
    hops = len(weights)
    total = b * c * n * t
    packable = (
        _LANE % c == 0
        and (_LANE // c) % n == 0
        and total % _LANE == 0
        and all(w.shape == (c, c) for w in weights)
    )
    if not packable:
        # TODO(synk): shapes that don't admit the free lane packing (C | 128, N | 128/C,
        # C == F) fall back to plain JAX/XLA; not exercised by this module's config.
        return (_gcn_ref_jax(h_c, adj, weights, biases, alpha),
                _gcn_ref_jax(h_c, adj_aug, weights, biases, alpha))

    p = _LANE // c                           # original rows per packed row
    rp = total // _LANE                      # packed rows
    # Per-lane node scale: packed row i, lane l holds original row r = i*p + l//c whose
    # node index is r % n; since p % n == 0 the lane pattern is identical for every
    # packed row -> a single resident (2, 128) vector covers both adjacencies.
    lane_node = (jnp.arange(_LANE) // c) % n
    scales = jnp.stack([_diag_scale(adj)[lane_node],
                        _diag_scale(adj_aug)[lane_node]]).astype(jnp.float32)  # (2,128)

    eye_p = jnp.eye(p, dtype=jnp.float32)
    w_stack = jnp.stack([jnp.kron(eye_p, w.T.astype(jnp.float32)) for w in weights])
    w_stack = w_stack.astype(storage_dtype)                            # (hops, 128, 128)
    b_stack = jnp.stack([jnp.tile(bb.astype(jnp.float32), p)[None, :]
                         for bb in biases])                            # (hops, 1, 128)

    h_flat = h_c.reshape(rp, _LANE)                                    # free raw reshape
    if h_flat.dtype != storage_dtype:
        h_flat = h_flat.astype(storage_dtype)                          # no-op in fast path
    rp_pad = _pad8(rp)
    if rp_pad != rp:                         # keep tiles bounded even for odd row counts
        h_flat = jnp.pad(h_flat, ((0, rp_pad - rp), (0, 0)))

    item = jnp.dtype(storage_dtype).itemsize
    trp = _pick_trp(rp_pad, item)
    kernel = functools.partial(_gcn_packed_kernel, alpha=float(alpha), hops=hops,
                               mxu_dtype=storage_dtype)
    # NOTE: resident operands (scales/weights/biases) total only ~hops*33 KiB in this
    # layout, so the default double buffering of them is negligible VMEM.
    z1p, z2p = pl.pallas_call(
        kernel,
        out_shape=(jax.ShapeDtypeStruct((rp_pad, _LANE), storage_dtype),
                   jax.ShapeDtypeStruct((rp_pad, _LANE), storage_dtype)),
        grid_spec=pltpu.PrefetchScalarGridSpec(
            num_scalar_prefetch=0,
            grid=(rp_pad // trp,),
            in_specs=[
                pl.BlockSpec((trp, _LANE), lambda g: (g, 0)),             # packed h tile
                pl.BlockSpec((2, _LANE), lambda g: (0, 0)),               # scales
                pl.BlockSpec((hops, _LANE, _LANE), lambda g: (0, 0, 0)),  # I⊗Wᵀ stack
                pl.BlockSpec((hops, 1, _LANE), lambda g: (0, 0, 0)),      # bias lanes
            ],
            out_specs=[pl.BlockSpec((trp, _LANE), lambda g: (g, 0)),
                       pl.BlockSpec((trp, _LANE), lambda g: (g, 0))],
        ),
        compiler_params=pltpu.CompilerParams(dimension_semantics=("parallel",)),
    )(h_flat, scales, w_stack, b_stack)
    if rp_pad != rp:
        z1p, z2p = z1p[:rp], z2p[:rp]
    return z1p.reshape(b, c, n, -1), z2p.reshape(b, c, n, -1)


# --------------------------------------------------------------------------------------
# SpatialHeteroModel head (tiny global reductions) + sinkhorn
# --------------------------------------------------------------------------------------
def _l2_normalize(x, axis=1, eps=1e-12):
    nrm = jnp.sqrt(jnp.sum(x * x, axis=axis, keepdims=True))
    return x / jnp.maximum(nrm, eps)


def _sinkhorn(out, epsilon=0.05, sinkhorn_iterations=3):
    Q = jnp.exp(out / epsilon).T
    K, B = Q.shape
    Q = Q / jnp.sum(Q)
    for _ in range(sinkhorn_iterations):
        Q = Q / jnp.sum(Q, axis=1, keepdims=True)
        Q = Q / K
        Q = Q / jnp.sum(Q, axis=0, keepdims=True)
        Q = Q / B
    return (Q * B).T


# TODO(synk): the SHM head (l2norm, prototype matmul, sinkhorn, log-softmax loss) is a
# handful of tiny global reductions over a (b*n, K) matrix; kept in plain JAX/XLA.
def shm_forward(z1, z2, proto_w, tau):
    b, c, n, t = z1.shape
    d_model = c * t
    w = _l2_normalize(proto_w.astype(jnp.float32), axis=1)   # forward-time weight renorm
    zf1 = _l2_normalize(z1.reshape(-1, d_model).astype(jnp.float32), axis=1)
    zf2 = _l2_normalize(z2.reshape(-1, d_model).astype(jnp.float32), axis=1)
    zc1 = zf1 @ w.T
    zc2 = zf2 @ w.T
    q1 = jax.lax.stop_gradient(_sinkhorn(zc1))
    q2 = jax.lax.stop_gradient(_sinkhorn(zc2))
    l1 = -jnp.mean(jnp.sum(q1 * jax.nn.log_softmax(zc2 / tau, axis=1), axis=1))
    l2 = -jnp.mean(jnp.sum(q2 * jax.nn.log_softmax(zc1 / tau, axis=1), axis=1))
    clu = zc1.reshape(b, n, -1)
    return clu, l1 + l2


# --------------------------------------------------------------------------------------
# SSL_cluster forward
# --------------------------------------------------------------------------------------
def ssl_cluster_forward(x, x_aug, adj, adj_aug, params, *, alpha, hop, tau=0.5,
                        storage_dtype=jnp.bfloat16):
    # NOTE: the PyTorch forward also runs start_conv(x_aug) but never uses that result
    # (z2 = gcn_1(x, adj_aug)); that dead compute is skipped. start_conv_1, nn.Dropout
    # and apply_bn are never called in forward.
    del x_aug
    xc = conv1x1_pallas(x, params["w_sc"], params["b_sc"], out_dtype=storage_dtype)
    z1, z2 = gcn1_dual_forward(xc, adj, adj_aug,
                               params["gcn_w"][:hop], params["gcn_b"][:hop],
                               alpha, storage_dtype)
    A, s_loss = shm_forward(z1, z2, params["proto_w"], tau)
    return s_loss, A, z1


def ssl_cluster_ref(x, x_aug, adj, adj_aug, params, *, alpha, hop, tau=0.5):
    """Pure-JAX f32 reference mirroring the PyTorch forward exactly."""
    del x_aug
    xc = (jnp.einsum('oi,bint->bont', params["w_sc"], x)
          + params["b_sc"][None, :, None, None])

    def gcn(h_c, a):
        b, c, n, t = h_c.shape
        h = h_c.reshape(-1, n, c)
        rowsum = jnp.sum(a, axis=-1, keepdims=True)
        a_n = a / jnp.where(rowsum > 1e-8, rowsum, 1e-8)
        d = jnp.diagonal(a_n)
        for i in range(hop):
            h = h * d[None, :, None]                          # einsum('kk,mkc->mkc')
            h = h @ params["gcn_w"][i].T + params["gcn_b"][i]
            h = jnp.where(h > 0, h, alpha * h)
        return h.reshape(b, c, n, -1)

    z1 = gcn(xc, adj)
    z2 = gcn(xc, adj_aug)
    A, s_loss = shm_forward(z1, z2, params["proto_w"], tau)
    return s_loss, A, z1


if __name__ == "__main__":
    # SSL_cluster(in_features, out_features, t_len, dropout, alpha, latend_num, gcn_hop)
    b, in_features, n, t = 2, 3, 16, 8
    out_features, t_len, latend_num, gcn_hop = 4, 8, 6, 2
    alpha, tau = 0.2, 0.5
    # dropout is constructed by the module but never applied in forward.

    key = jax.random.PRNGKey(0)
    ks = jax.random.split(key, 8)
    x = jax.random.normal(ks[0], (b, in_features, n, t), jnp.float32)
    x_aug = jax.random.normal(ks[1], (b, in_features, n, t), jnp.float32)
    adj = jax.random.uniform(ks[2], (n, n), jnp.float32)
    adj_aug = jax.random.uniform(ks[3], (n, n), jnp.float32)

    bound_sc = 1.0 / math.sqrt(in_features)
    params = {
        "w_sc": jax.random.uniform(ks[4], (out_features, in_features), jnp.float32,
                                   -bound_sc, bound_sc),
        "b_sc": jax.random.uniform(ks[5], (out_features,), jnp.float32,
                                   -bound_sc, bound_sc),
        "gcn_w": [],
        "gcn_b": [],
    }
    kk = ks[6]
    for i in range(gcn_hop):
        fin = out_features            # GCN1 inside SSL_cluster: in_features == out_features
        kk, kw, kb = jax.random.split(kk, 3)
        bnd = 1.0 / math.sqrt(fin)
        params["gcn_w"].append(
            jax.random.uniform(kw, (out_features, fin), jnp.float32, -bnd, bnd))
        params["gcn_b"].append(
            jax.random.uniform(kb, (out_features,), jnp.float32, -bnd, bnd))
    d_model = out_features * t_len
    xav = math.sqrt(6.0 / (d_model + latend_num))
    params["proto_w"] = jax.random.uniform(ks[7], (latend_num, d_model), jnp.float32,
                                           -xav, xav)

    s_ref, A_ref, z1_ref = ssl_cluster_ref(x, x_aug, adj, adj_aug, params,
                                           alpha=alpha, hop=gcn_hop, tau=tau)

    # 1) exact-semantics run (f32 HBM storage) -> tight check against the reference
    s32, A32, z32 = ssl_cluster_forward(x, x_aug, adj, adj_aug, params,
                                        alpha=alpha, hop=gcn_hop, tau=tau,
                                        storage_dtype=jnp.float32)
    jax.block_until_ready((s32, A32, z32))
    assert z32.shape == (b, out_features, n, t), z32.shape
    assert A32.shape == (b, n, latend_num), A32.shape
    assert jnp.allclose(z32, z1_ref, atol=1e-3, rtol=1e-3), \
        float(jnp.max(jnp.abs(z32 - z1_ref)))
    assert jnp.allclose(A32, A_ref, atol=1e-3, rtol=1e-3), \
        float(jnp.max(jnp.abs(A32 - A_ref)))
    assert jnp.allclose(s32, s_ref, atol=1e-2, rtol=1e-2), (float(s32), float(s_ref))

    # 2) bandwidth-optimized run (bf16 HBM storage, f32 MXU accumulate)
    sb, Ab, zb = ssl_cluster_forward(x, x_aug, adj, adj_aug, params,
                                     alpha=alpha, hop=gcn_hop, tau=tau,
                                     storage_dtype=jnp.bfloat16)
    jax.block_until_ready((sb, Ab, zb))
    assert jnp.allclose(zb.astype(jnp.float32), z1_ref, atol=3e-2, rtol=3e-2), \
        float(jnp.max(jnp.abs(zb.astype(jnp.float32) - z1_ref)))
    assert bool(jnp.isfinite(sb)) and Ab.shape == (b, n, latend_num)

    print("KERNEL_OK")
</pallas_src>

<mosaic_0001>
module attributes {stable_mosaic.version = 11 : i64} {
  func.func @_conv1x1_kernel(%arg0: i32, %arg1: i32, %arg2: memref<2x3x128xf32, #tpu.memory_space<vmem>>, %arg3: memref<4x3xf32, #tpu.memory_space<vmem>>, %arg4: memref<4x1xf32, #tpu.memory_space<vmem>>, %arg5: memref<2x4x128xf32, #tpu.memory_space<vmem>>) attributes {dimension_semantics = [#tpu.dimension_semantics<parallel>, #tpu.dimension_semantics<parallel>], iteration_bounds = array<i64: 1, 1>, scalar_prefetch = 0 : i64, scratch_operands = 0 : i64, tpu.core_type = #tpu.core_type<tc>, window_params = [{transform_indices = @transform_0, window_bounds = array<i64: 2, 3, 128>}, {pipeline_mode = #tpu.pipeline_mode<synchronous>, transform_indices = @transform_1, window_bounds = array<i64: 4, 3>}, {pipeline_mode = #tpu.pipeline_mode<synchronous>, transform_indices = @transform_2, window_bounds = array<i64: 4, 1>}, {transform_indices = @transform_3, window_bounds = array<i64: 2, 4, 128>}]} {
    %c0 = arith.constant 0 : index
    %c0_0 = arith.constant 0 : index
    %0 = vector.load %arg3[%c0, %c0_0] : memref<4x3xf32, #tpu.memory_space<vmem>>, vector<4x3xf32>
    %c0_1 = arith.constant 0 : index
    %c0_2 = arith.constant 0 : index
    %1 = vector.load %arg4[%c0_1, %c0_2] : memref<4x1xf32, #tpu.memory_space<vmem>>, vector<4x1xf32>
    %c0_3 = arith.constant 0 : index
    %c0_4 = arith.constant 0 : index
    %c0_5 = arith.constant 0 : index
    %2 = vector.load %arg2[%c0_3, %c0_4, %c0_5] : memref<2x3x128xf32, #tpu.memory_space<vmem>>, vector<1x3x128xf32>
    %3 = vector.shape_cast %2 : vector<1x3x128xf32> to vector<3x128xf32>
    %cst = arith.constant dense<0.000000e+00> : vector<4x128xf32>
    %4 = tpu.matmul %0, %3, %cst {dimension_numbers = #tpu.dot_dimension_numbers<[1], [0], [0], [1], [0, 0, 1, 1], [], []>} : vector<4x3xf32>, vector<3x128xf32>, vector<4x128xf32> -> vector<4x128xf32>
    %5 = vector.broadcast %1 : vector<4x1xf32> to vector<4x128xf32>
    %6 = arith.addf %4, %5 : vector<4x128xf32>
    %c0_6 = arith.constant 0 : index
    %c0_7 = arith.constant 0 : index
    %c0_8 = arith.constant 0 : index
    %7 = vector.load %arg5[%c0_6, %c0_7, %c0_8] : memref<2x4x128xf32, #tpu.memory_space<vmem>>, vector<1x4x128xf32>
    %8 = vector.shape_cast %7 : vector<1x4x128xf32> to vector<4x128xf32>
    %9 = vector.shape_cast %6 : vector<4x128xf32> to vector<1x4x128xf32>
    tpu.vector_store %arg5[%c0_6, %c0_7, %c0_8], %9 {strides = array<i32>} : memref<2x4x128xf32, #tpu.memory_space<vmem>>, vector<1x4x128xf32>,
    %c1 = arith.constant 1 : index
    %c0_9 = arith.constant 0 : index
    %c0_10 = arith.constant 0 : index
    %10 = vector.load %arg2[%c1, %c0_9, %c0_10] : memref<2x3x128xf32, #tpu.memory_space<vmem>>, vector<1x3x128xf32>
    %11 = vector.shape_cast %10 : vector<1x3x128xf32> to vector<3x128xf32>
    %cst_11 = arith.constant dense<0.000000e+00> : vector<4x128xf32>
    %12 = tpu.matmul %0, %11, %cst_11 {dimension_numbers = #tpu.dot_dimension_numbers<[1], [0], [0], [1], [0, 0, 1, 1], [], []>} : vector<4x3xf32>, vector<3x128xf32>, vector<4x128xf32> -> vector<4x128xf32>
    %13 = vector.broadcast %1 : vector<4x1xf32> to vector<4x128xf32>
    %14 = arith.addf %12, %13 : vector<4x128xf32>
    %c1_12 = arith.constant 1 : index
    %c0_13 = arith.constant 0 : index
    %c0_14 = arith.constant 0 : index
    %15 = vector.load %arg5[%c1_12, %c0_13, %c0_14] : memref<2x4x128xf32, #tpu.memory_space<vmem>>, vector<1x4x128xf32>
    %16 = vector.shape_cast %15 : vector<1x4x128xf32> to vector<4x128xf32>
    %17 = vector.shape_cast %14 : vector<4x128xf32> to vector<1x4x128xf32>
    tpu.vector_store %arg5[%c1_12, %c0_13, %c0_14], %17 {strides = array<i32>} : memref<2x4x128xf32, #tpu.memory_space<vmem>>, vector<1x4x128xf32>,
    return
  }
  func.func @transform_0(%arg0: i32, %arg1: i32) -> (i32, i32, i32) {
    %c0_i32 = arith.constant 0 : i32
    %c0_i32_0 = arith.constant 0 : i32
    return %arg0, %c0_i32, %arg1 : i32, i32, i32
  }
  func.func @transform_1(%arg0: i32, %arg1: i32) -> (i32, i32) {
    %c0_i32 = arith.constant 0 : i32
    %c0_i32_0 = arith.constant 0 : i32
    %c0_i32_1 = arith.constant 0 : i32
    return %c0_i32, %c0_i32_0 : i32, i32
  }
  func.func @transform_2(%arg0: i32, %arg1: i32) -> (i32, i32) {
    %c0_i32 = arith.constant 0 : i32
    %c0_i32_0 = arith.constant 0 : i32
    %c0_i32_1 = arith.constant 0 : i32
    return %c0_i32, %c0_i32_0 : i32, i32
  }
  func.func @transform_3(%arg0: i32, %arg1: i32) -> (i32, i32, i32) {
    %c0_i32 = arith.constant 0 : i32
    %c0_i32_0 = arith.constant 0 : i32
    return %arg0, %c0_i32, %arg1 : i32, i32, i32
  }
}

</mosaic_0001>

<llo_original>
// kernel: tpu_custom_call.1
$region0: #{tpu_custom_call.1}
  #allocation0 [shape = 'u32[]', space=smem, size = 0x4, offset = 0x4, fixed_abs, tag = 'smem constant byte address 0x4 - core index']
  #allocation1 [shape = 'u32[144,128]{1,0:T(1,128)}', space=vmem, size = 0x12000, scoped, tag = 'internal scratch']
  %s0 = inlined_call_operand.vmem [shape: f32[2,3,128], index: 0, kind: input, shape index: {}]
  %s1 = inlined_call_operand.vmem [shape: f32[4,3], index: 1, kind: input, shape index: {}]
  %s2 = inlined_call_operand.vmem [shape: f32[4,1], index: 2, kind: input, shape index: {}]
  %s3 = inlined_call_operand.hbm [shape: f32[2,4,128], index: 3, kind: output, shape index: {}]
  %s4 = sld [smem:[#allocation0]]
  $region22: #{tpu_custom_call.1} parent=0
    _
  %s6 = ssub.s32 1, %s4
  %s7 = scalar_select 0, %s6, %s4
  $region1: #{tpu_custom_call.1} parent=0
    #allocation2 [shape = 'u8[4096]{0}', space=vmem, size = 0x1000, scoped, tag = 'output window, operand 0, single buffered']
    #allocation3 [shape = 's32[1]{0}', space=sflag, size = 0x4, scoped, tag = 'scoped memory for tpu_custom_call.1']
    %8 = vsyncpa [#allocation3], 0
    // Predicated region
    $region2: #{tpu_custom_call.1} parent=1 // pred_check
      _
    $region3: #{tpu_custom_call.1} parent=1 // pred_check_branch
      %10 = sbr.rel (0) target = $region5
    $region4: #{tpu_custom_call.1} parent=1 // pred_region
      _
    $region5: #{tpu_custom_call.1} parent=1 // pred_fallthru
      _
    // Predicated region
    $region6: #{tpu_custom_call.1} parent=1 // pred_check
      _
    $region7: #{tpu_custom_call.1} parent=1 // pred_check_branch
      %12 = sbr.rel (0) target = $region9
    $region8: #{tpu_custom_call.1} parent=1 // pred_region
      _
    $region9: #{tpu_custom_call.1} parent=1 // pred_fallthru
      _
    // Predicated region
    $region10: #{tpu_custom_call.1} parent=1 // pred_check
      _
    $region11: #{tpu_custom_call.1} parent=1 // pred_check_branch
      %14 = sbr.rel (0) target = $region13
    $region12: #{tpu_custom_call.1} parent=1 // pred_region
      _
    $region13: #{tpu_custom_call.1} parent=1 // pred_fallthru
      _
    %v15 = vld [vmem:[%s1] sm:$0xf]
    %v16 = vld [vmem:[%s2] sm:$0xf]
    %v17 = vld [vmem:[%s0] sm:$0x7]
    %19 = vset.pattern.permute.xlu0 0
    %20 = vperm.xlu0 %19, %v16
    %v21 = vpop.permute.xlu0 %20
    %vm23 = vcmask 23552
    %v25 = vsel %vm23, %v15, 0
    %vm27 = vcmask 1042432
    %v29 = vsel %vm27, %v17, 0
    %31 = vmatprep.subr.mxu0 0.0
    %32 = vmatpush1.msra.mxu0 %v29
    %33 = vmatprep.subr.mxu0 0.0
    %34 = vmatpush1.msra.mxu0 0.0
    %35 = vmatprep.subr.mxu0 0.0
    %36 = vmatpush1.msra.mxu0 0.0
    %37 = vmatprep.subr.mxu0 0.0
    %38 = vmatpush1.msra.mxu0 0.0
    %39 = vmatprep.subr.mxu0 0.0
    %40 = vmatpush1.msra.mxu0 0.0
    %41 = vmatprep.subr.mxu0 0.0
    %42 = vmatpush1.msra.mxu0 0.0
    %43 = vmatprep.subr.mxu0 0.0
    %44 = vmatpush1.msra.mxu0 0.0
    %45 = vmatprep.subr.mxu0 0.0
    %46 = vmatpush1.msra.mxu0 0.0
    %47 = vmatprep.subr.mxu0 0.0
    %48 = vmatpush1.msra.mxu0 0.0
    %49 = vmatprep.subr.mxu0 0.0
    %50 = vmatpush1.msra.mxu0 0.0
    %51 = vmatprep.subr.mxu0 0.0
    %52 = vmatpush1.msra.mxu0 0.0
    %53 = vmatprep.subr.mxu0 0.0
    %54 = vmatpush1.msra.mxu0 0.0
    %55 = vmatprep.subr.mxu0 0.0
    %56 = vmatpush1.msra.mxu0 0.0
    %57 = vmatprep.subr.mxu0 0.0
    %58 = vmatpush1.msra.mxu0 0.0
    %59 = vmatprep.subr.mxu0 0.0
    %60 = vmatpush1.msra.mxu0 0.0
    %61 = vmatprep.subr.mxu0 0.0
    %62 = vmatpush1.msra.mxu0 0.0
    %63 = vmatprep.subr.mxu0 0.0
    %64 = vmatpush1.msra.mxu0 0.0
    %65 = vmatprep.subr.mxu0 0.0
    %66 = vmatpush1.msra.mxu0 0.0
    %67 = vmatprep.subr.mxu0 0.0
    %68 = vmatpush1.msra.mxu0 0.0
    %69 = vmatprep.subr.mxu0 0.0
    %70 = vmatpush1.msra.mxu0 0.0
    %71 = vmatprep.subr.mxu0 0.0
    %72 = vmatpush1.msra.mxu0 0.0
    %73 = vmatprep.subr.mxu0 0.0
    %74 = vmatpush1.msra.mxu0 0.0
    %75 = vmatprep.subr.mxu0 0.0
    %76 = vmatpush1.msra.mxu0 0.0
    %77 = vmatprep.subr.mxu0 0.0
    %78 = vmatpush1.msra.mxu0 0.0
    %79 = vmatprep.subr.mxu0 0.0
    %80 = vmatpush1.msra.mxu0 0.0
    %81 = vmatprep.subr.mxu0 0.0
    %82 = vmatpush1.msra.mxu0 0.0
    %83 = vmatprep.subr.mxu0 0.0
    %84 = vmatpush1.msra.mxu0 0.0
    %85 = vmatprep.subr.mxu0 0.0
    %86 = vmatpush1.msra.mxu0 0.0
    %87 = vmatprep.subr.mxu0 0.0
    %88 = vmatpush1.msra.mxu0 0.0
    %89 = vmatprep.subr.mxu0 0.0
    %90 = vmatpush1.msra.mxu0 0.0
    %91 = vmatprep.subr.mxu0 0.0
    %92 = vmatpush1.msra.mxu0 0.0
    %93 = vmatprep.subr.mxu0 0.0
    %94 = vmatpush1.msra.mxu0 0.0
    %95 = vmatprep.mubr.f32.mxu0 0.0
    %96 = vmatmul.mubr.f32.gmra.mrb[0].mxu0 %v25
    %v97 = vpop.f32.mrb[0].mxu0
    %v98 = vadd.f32 %v21, %v97
    %v99 = vpop.f32.mrb[0].mxu0
    %100 = vdwg.mxu0
    %101 = vst [vmem:[#allocation2] sm:$0xf] %v98
    %s102 = scalar_lea.vmem %s0, 4
    %v103 = vld [vmem:[%s102] sm:$0x7]
    %v105 = vsel %vm27, %v103, 0
    %107 = vmatprep.subr.mxu0 0.0
    %108 = vmatpush1.msra.mxu0 %v105
    %109 = vmatprep.subr.mxu0 0.0
    %110 = vmatpush1.msra.mxu0 0.0
    %111 = vmatprep.subr.mxu0 0.0
    %112 = vmatpush1.msra.mxu0 0.0
    %113 = vmatprep.subr.mxu0 0.0
    %114 = vmatpush1.msra.mxu0 0.0
    %115 = vmatprep.subr.mxu0 0.0
    %116 = vmatpush1.msra.mxu0 0.0
    %117 = vmatprep.subr.mxu0 0.0
    %118 = vmatpush1.msra.mxu0 0.0
    %119 = vmatprep.subr.mxu0 0.0
    %120 = vmatpush1.msra.mxu0 0.0
    %121 = vmatprep.subr.mxu0 0.0
    %122 = vmatpush1.msra.mxu0 0.0
    %123 = vmatprep.subr.mxu0 0.0
    %124 = vmatpush1.msra.mxu0 0.0
    %125 = vmatprep.subr.mxu0 0.0
    %126 = vmatpush1.msra.mxu0 0.0
    %127 = vmatprep.subr.mxu0 0.0
    %128 = vmatpush1.msra.mxu0 0.0
    %129 = vmatprep.subr.mxu0 0.0
    %130 = vmatpush1.msra.mxu0 0.0
    %131 = vmatprep.subr.mxu0 0.0
    %132 = vmatpush1.msra.mxu0 0.0
    %133 = vmatprep.subr.mxu0 0.0
    %134 = vmatpush1.msra.mxu0 0.0
    %135 = vmatprep.subr.mxu0 0.0
    %136 = vmatpush1.msra.mxu0 0.0
    %137 = vmatprep.subr.mxu0 0.0
    %138 = vmatpush1.msra.mxu0 0.0
    %139 = vmatprep.subr.mxu0 0.0
    %140 = vmatpush1.msra.mxu0 0.0
    %141 = vmatprep.subr.mxu0 0.0
    %142 = vmatpush1.msra.mxu0 0.0
    %143 = vmatprep.subr.mxu0 0.0
    %144 = vmatpush1.msra.mxu0 0.0
    %145 = vmatprep.subr.mxu0 0.0
    %146 = vmatpush1.msra.mxu0 0.0
    %147 = vmatprep.subr.mxu0 0.0
    %148 = vmatpush1.msra.mxu0 0.0
    %149 = vmatprep.subr.mxu0 0.0
    %150 = vmatpush1.msra.mxu0 0.0
    %151 = vmatprep.subr.mxu0 0.0
    %152 = vmatpush1.msra.mxu0 0.0
    %153 = vmatprep.subr.mxu0 0.0
    %154 = vmatpush1.msra.mxu0 0.0
    %155 = vmatprep.subr.mxu0 0.0
    %156 = vmatpush1.msra.mxu0 0.0
    %157 = vmatprep.subr.mxu0 0.0
    %158 = vmatpush1.msra.mxu0 0.0
    %159 = vmatprep.subr.mxu0 0.0
    %160 = vmatpush1.msra.mxu0 0.0
    %161 = vmatprep.subr.mxu0 0.0
    %162 = vmatpush1.msra.mxu0 0.0
    %163 = vmatprep.subr.mxu0 0.0
    %164 = vmatpush1.msra.mxu0 0.0
    %165 = vmatprep.subr.mxu0 0.0
    %166 = vmatpush1.msra.mxu0 0.0
    %167 = vmatprep.subr.mxu0 0.0
    %168 = vmatpush1.msra.mxu0 0.0
    %169 = vmatprep.subr.mxu0 0.0
    %170 = vmatpush1.msra.mxu0 0.0
    %171 = vmatprep.mubr.f32.mxu0 0.0
    %172 = vmatmul.mubr.f32.gmra.mrb[0].mxu0 %v25
    %v173 = vpop.f32.mrb[0].mxu0
    %v174 = vadd.f32 %v21, %v173
    %v175 = vpop.f32.mrb[0].mxu0
    %176 = vdwg.mxu0
    %s177 = scalar_lea.vmem [#allocation2], 4
    %178 = vst [vmem:[%s177] sm:$0xf] %v174
    // Predicated region
    $region14: #{tpu_custom_call.1} parent=1 // pred_check
      _
    $region15: #{tpu_custom_call.1} parent=1 // pred_check_branch
      %180 = sbr.rel (0) target = $region17
    $region16: #{tpu_custom_call.1} parent=1 // pred_region
      %s182 = ssub.s32 128, 128
      %183 = vsyncadd [#allocation3], %s182
      %s184 = sshll.u32 [#allocation2], 4
      %s185 = int_to_ptr.vmem [resolvable:$true] %s184
      %190 = dma.vmem_to_hbm [thread:$0]  %s185, 128, %s3, [#allocation3], 64, 64, 4
    $region17: #{tpu_custom_call.1} parent=1 // pred_fallthru
      _
    // Predicated region
    $region18: #{tpu_custom_call.1} parent=1 // pred_check
      _
    $region19: #{tpu_custom_call.1} parent=1 // pred_check_branch
      %192 = sbr.rel (0) target = $region21
    $region20: #{tpu_custom_call.1} parent=1 // pred_region
      %193 = dma.done [#allocation3], 128
    $region21: #{tpu_custom_call.1} parent=1 // pred_fallthru
      _
    %194 = vsyncpa [#allocation3], 1

</llo_original>
